<compile_context>
chip_gen: v5e
topology: v5e:2x2
jax: 0.10.0
libtpu: 0.0.40
codegen_flags: <defaults>
</compile_context>

<pallas_src>
import functools

import jax
import jax.numpy as jnp
from jax import lax
from jax.experimental import pallas as pl
from jax.experimental.pallas import tpu as pltpu


# ---------------------------------------------------------------------------
# Pallas kernel: n_layers fused highway-CNN units for a block of image PAIRS.
#   x_ref    : (B, Hp, 2*WC)          row-zero-padded, pair-lane-packed input
#   wb_ref   : (L, K*2*WC, 4*WC)      K-stacked block-diag conv weights,
#                                     columns = [A_H | B_H | A_T | B_T]
#   bias_ref : (L, 1, 4*WC)           biases, same column layout (f32)
#   o_ref    : (B, H, 2*WC)           pair-lane-packed output
#   buf      : (B, Hp, 2*WC) f32      activation, resident across all layers
#   slab     : (B*H, K*2*WC) mm_dtype K-stacked matmul LHS staging buffer
# ---------------------------------------------------------------------------
def _highway_stack_kernel(x_ref, wb_ref, bias_ref, o_ref, buf, slab,
                          *, n_layers, ksize, H, pad, lanes):
    B = buf.shape[0]
    M = B * H
    mm_dtype = wb_ref.dtype

    # Activation (incl. per-image zero pad rows) lives in VMEM for the whole
    # stack; pad rows are never overwritten, which IS the SAME padding for
    # every layer (also between images stacked along the sublane axis).
    buf[...] = x_ref[...]

    for layer in range(n_layers):                      # small static unroll
        # Build the K-stacked slab: lane chunk ky holds the ky-shifted rows of
        # every image in the block -> ONE fused H/T matmul per layer.
        for ky in range(ksize):
            slab[:, ky * lanes:(ky + 1) * lanes] = (
                buf[:, ky:ky + H, :].reshape(M, lanes).astype(mm_dtype))

        acc = jnp.dot(slab[...], wb_ref[layer],
                      preferred_element_type=jnp.float32)   # (M, 2*lanes) f32
        acc = acc + bias_ref[layer]                          # single bias add

        h_br = jnp.maximum(acc[:, :lanes], 0.0)   # [A_H | B_H] ReLU (128 lanes)
        t_br = jax.nn.sigmoid(acc[:, lanes:])     # [A_T | B_T] gate  (EUP, f32)
        x_in = buf[:, pad:pad + H, :].reshape(M, lanes)      # residual path
        y = x_in + t_br * (h_br - x_in)                      # highway combine

        if layer == n_layers - 1:
            o_ref[...] = y.reshape(B, H, lanes).astype(o_ref.dtype)
        else:
            buf[:, pad:pad + H, :] = y.reshape(B, H, lanes)  # stay on-chip


# ---------------------------------------------------------------------------
# Host-side (plain JAX) weight packing.
# ---------------------------------------------------------------------------
def _banded_conv_matrix(w, ksize, W, C, pad):
    """torch OIHW conv weight -> banded block-Toeplitz matrices (K, W*C, W*C).

    slab(H, W*C) @ band[ky] accumulates the ky-th row of taps of the conv for
    one image; SAME zero padding along W is folded into the band clipping."""
    kx = jnp.arange(W)[:, None] - jnp.arange(W)[None, :] + pad   # (W_in, W_out)
    valid = (kx >= 0) & (kx < ksize)
    kx_c = jnp.clip(kx, 0, ksize - 1)
    g = w[:, :, :, kx_c]                                  # (co, ci, ky, Win, Wout)
    g = g * valid[None, None, None, :, :]
    g = jnp.transpose(g, (2, 3, 1, 4, 0))                 # (ky, Win, ci, Wout, co)
    return g.reshape(ksize, W * C, W * C)


def _pair_and_stack(bh, bt, ksize, WC):
    """Per-tap block-diagonal (image A / image B lanes) + H|T fusion +
    K-stacking along rows.  Result: (K*2*WC, 4*WC), columns [A_H|B_H|A_T|B_T]."""
    def blockdiag(m):                                      # (K, WC, WC) -> (K, 2WC, 2WC)
        z = jnp.zeros_like(m)
        top = jnp.concatenate([m, z], axis=-1)             # A-in -> [A | 0]
        bot = jnp.concatenate([z, m], axis=-1)             # B-in -> [0 | B]
        return jnp.concatenate([top, bot], axis=1)
    fused = jnp.concatenate([blockdiag(bh), blockdiag(bt)], axis=-1)  # (K, 2WC, 4WC)
    return fused.reshape(ksize * 2 * WC, 4 * WC)


# ---------------------------------------------------------------------------
# HighwayRHCNN forward (highway_type='highway').  NCHW in / NCHW out.
# ---------------------------------------------------------------------------
def highway_rhcnn_forward(x_nchw, params, *, kernel_size, stride=1,
                          highway_type="highway",
                          matmul_dtype=jnp.bfloat16, block_pairs=4):
    assert highway_type == "highway", "only the 'highway' unit type is implemented"
    assert stride == 1, "highway residual requires stride == 1"
    N, C, H, W = x_nchw.shape
    for (w_h, b_h, w_t, b_t) in params:
        assert w_h.shape == (C, C, kernel_size, kernel_size), \
            "highway residual requires C_in == C_out"
        assert w_t.shape == w_h.shape and b_h.shape == (C,) and b_t.shape == (C,)

    K = kernel_size
    pad = K // 2
    Hp = H + 2 * pad
    WC = W * C
    lanes = 2 * WC                      # two images side-by-side along the lane axis
    L = len(params)

    # ---- packed weights (L, K*2WC, 4WC) and biases (L, 1, 4WC), cols [A_H|B_H|A_T|B_T]
    wb_list, bias_list = [], []
    for (w_h, b_h, w_t, b_t) in params:
        bh = _banded_conv_matrix(w_h, K, W, C, pad)
        bt = _banded_conv_matrix(w_t, K, W, C, pad)
        wb_list.append(_pair_and_stack(bh, bt, K, WC))
        bias_list.append(jnp.concatenate(
            [jnp.tile(b_h, W), jnp.tile(b_h, W),
             jnp.tile(b_t, W), jnp.tile(b_t, W)])[None, :])
    wb = jnp.stack(wb_list).astype(matmul_dtype)           # (L, K*lanes, 2*lanes)
    bias = jnp.stack(bias_list).astype(jnp.float32)        # (L, 1, 2*lanes)

    # ---- input packing: NCHW -> NHWC -> zero-pad rows -> (N, Hp, WC) -> pair lanes
    x_nhwc = jnp.transpose(x_nchw, (0, 2, 3, 1)).astype(jnp.float32)
    x_pad = jnp.pad(x_nhwc, ((0, 0), (pad, pad), (0, 0), (0, 0)))
    x_rows = x_pad.reshape(N, Hp, WC)
    if N % 2:                                              # pad odd batch with a zero image
        x_rows = jnp.concatenate([x_rows, jnp.zeros((1, Hp, WC), jnp.float32)], 0)
    n_pairs = (N + 1) // 2
    x_pairs = (x_rows.reshape(n_pairs, 2, Hp, WC)
               .transpose(0, 2, 1, 3).reshape(n_pairs, Hp, lanes))

    # ---- batch blocking along the grid (pairs stacked on sublanes inside the kernel)
    B = min(block_pairs, n_pairs)
    G = -(-n_pairs // B)
    n_pad_pairs = G * B
    if n_pad_pairs > n_pairs:
        x_pairs = jnp.concatenate(
            [x_pairs, jnp.zeros((n_pad_pairs - n_pairs, Hp, lanes), jnp.float32)], 0)

    # ---- VMEM budget (counts the x2 double-buffering of every pipelined input)
    itm = jnp.dtype(matmul_dtype).itemsize
    vmem_est = (2 * B * Hp * lanes * 4                     # input blocks (double-buffered)
                + 2 * B * H * lanes * 4                    # output blocks (double-buffered)
                + 2 * (wb.size * itm + bias.size * 4)      # invariant but double-buffered
                + B * Hp * lanes * 4                       # activation scratch
                + B * H * K * lanes * itm                  # slab scratch
                + (4 << 20))                               # temporaries headroom
    vmem_limit = int(min(max(vmem_est, 16 << 20), 48 << 20))   # 48 MiB cap (v7x headroom)

    kernel = functools.partial(_highway_stack_kernel, n_layers=L, ksize=K,
                               H=H, pad=pad, lanes=lanes)

    out_pairs = pl.pallas_call(
        kernel,
        out_shape=jax.ShapeDtypeStruct((n_pad_pairs, H, lanes), jnp.float32),
        grid=(G,),
        in_specs=[
            pl.BlockSpec((B, Hp, lanes), lambda g: (g, 0, 0)),
            pl.BlockSpec((L, K * lanes, 2 * lanes), lambda g: (0, 0, 0)),
            pl.BlockSpec((L, 1, 2 * lanes), lambda g: (0, 0, 0)),
        ],
        out_specs=pl.BlockSpec((B, H, lanes), lambda g: (g, 0, 0)),
        scratch_shapes=[pltpu.VMEM((B, Hp, lanes), jnp.float32),
                        pltpu.VMEM((B * H, K * lanes), matmul_dtype)],
        compiler_params=pltpu.CompilerParams(
            dimension_semantics=("parallel",),
            vmem_limit_bytes=vmem_limit),
    )(x_pairs, wb, bias)

    # ---- unpack: (pairs, H, [A|B]*WC) -> (N, H, W, C) -> NCHW
    out = out_pairs.reshape(n_pad_pairs, H, 2, W, C)
    out = jnp.transpose(out, (0, 2, 1, 3, 4)).reshape(2 * n_pad_pairs, H, W, C)
    out = out[:N]
    return jnp.transpose(out, (0, 3, 1, 2))


def init_params(key, n_layers, in_channels, out_channels, kernel_size):
    assert in_channels == out_channels, "highway residual requires C_in == C_out"
    params = []
    scale = 0.3
    for _ in range(n_layers):
        key, k1, k2, k3, k4 = jax.random.split(key, 5)
        w_h = scale * jax.random.normal(
            k1, (out_channels, in_channels, kernel_size, kernel_size), jnp.float32)
        b_h = scale * jax.random.normal(k2, (out_channels,), jnp.float32)
        w_t = scale * jax.random.normal(
            k3, (out_channels, in_channels, kernel_size, kernel_size), jnp.float32)
        b_t = scale * jax.random.normal(k4, (out_channels,), jnp.float32)
        params.append((w_h, b_h, w_t, b_t))
    return params


# ---------------------------------------------------------------------------
# Plain-JAX reference (lax.conv) for correctness verification.
# ---------------------------------------------------------------------------
def _ref_forward(x_nchw, params, kernel_size):
    def conv(x, w, b):
        y = lax.conv_general_dilated(
            x, w, window_strides=(1, 1), padding="SAME",
            dimension_numbers=("NCHW", "OIHW", "NCHW"))
        return y + b[None, :, None, None]

    x = x_nchw
    for (w_h, b_h, w_t, b_t) in params:
        h = jnp.maximum(conv(x, w_h, b_h), 0.0)
        t = jax.nn.sigmoid(conv(x, w_t, b_t))
        x = t * h + (1.0 - t) * x
    return x


if __name__ == "__main__":
    # HighwayRHCNN(highway_type='highway', n_layers=2, in_channels=4,
    #              out_channels=4, kernel_size=3, stride=1)
    n_layers, in_channels, out_channels, kernel_size, stride = 2, 4, 4, 3, 1
    N, Hs, Ws = 2, 16, 16

    key = jax.random.PRNGKey(0)
    key, kx = jax.random.split(key)
    x = jax.random.normal(kx, (N, in_channels, Hs, Ws), jnp.float32)   # NCHW input
    params = init_params(key, n_layers, in_channels, out_channels, kernel_size)

    ref = jax.block_until_ready(_ref_forward(x, params, kernel_size))

    # f32 matmul path: strict check vs lax.conv reference.
    out_f32 = jax.block_until_ready(
        highway_rhcnn_forward(x, params, kernel_size=kernel_size, stride=stride,
                              matmul_dtype=jnp.float32))
    assert out_f32.shape == ref.shape == (N, out_channels, Hs, Ws)
    assert jnp.allclose(out_f32, ref, atol=1e-4, rtol=1e-4), "f32 mismatch vs reference"

    # Default path: bf16 matmul inputs (v5e/v6e/v7x MXU, halved weight DMA),
    # f32 accumulation + f32 gating math: loose check (weight/slab quantization).
    out_bf16 = jax.block_until_ready(
        highway_rhcnn_forward(x, params, kernel_size=kernel_size, stride=stride))
    rel_err = jnp.max(jnp.abs(out_bf16 - ref)) / (jnp.max(jnp.abs(ref)) + 1e-6)
    assert rel_err < 0.1, f"bf16 mismatch vs reference (rel_err={rel_err})"

    # Odd batch + multi-step grid (exercises pair padding, block padding, G>1).
    key, kx2 = jax.random.split(key)
    x5 = jax.random.normal(kx2, (5, in_channels, Hs, Ws), jnp.float32)
    ref5 = jax.block_until_ready(_ref_forward(x5, params, kernel_size))
    out5 = jax.block_until_ready(
        highway_rhcnn_forward(x5, params, kernel_size=kernel_size, stride=stride,
                              matmul_dtype=jnp.float32, block_pairs=2))
    assert jnp.allclose(out5, ref5, atol=1e-4, rtol=1e-4), "odd-batch mismatch vs reference"

    print("KERNEL_OK")
</pallas_src>

<mosaic_0001>
module attributes {stable_mosaic.version = 11 : i64} {
  func.func @_highway_stack_kernel(%arg0: i32, %arg1: memref<1x18x128xf32, #tpu.memory_space<vmem>>, %arg2: memref<2x384x256xf32, #tpu.memory_space<vmem>>, %arg3: memref<2x1x256xf32, #tpu.memory_space<vmem>>, %arg4: memref<1x16x128xf32, #tpu.memory_space<vmem>>, %arg5: memref<1x18x128xf32, #tpu.memory_space<vmem>>, %arg6: memref<16x384xf32, #tpu.memory_space<vmem>>) attributes {dimension_semantics = [#tpu.dimension_semantics<parallel>], iteration_bounds = array<i64: 1>, scalar_prefetch = 0 : i64, scratch_operands = 2 : i64, tpu.core_type = #tpu.core_type<tc>, window_params = [{transform_indices = @transform_0, window_bounds = array<i64: 1, 18, 128>}, {pipeline_mode = #tpu.pipeline_mode<synchronous>, transform_indices = @transform_1, window_bounds = array<i64: 2, 384, 256>}, {pipeline_mode = #tpu.pipeline_mode<synchronous>, transform_indices = @transform_2, window_bounds = array<i64: 2, 1, 256>}, {transform_indices = @transform_3, window_bounds = array<i64: 1, 16, 128>}]} {
    %c0 = arith.constant 0 : index
    %c0_0 = arith.constant 0 : index
    %c0_1 = arith.constant 0 : index
    %0 = vector.load %arg1[%c0, %c0_0, %c0_1] : memref<1x18x128xf32, #tpu.memory_space<vmem>>, vector<1x18x128xf32>
    %c0_2 = arith.constant 0 : index
    %c0_3 = arith.constant 0 : index
    %c0_4 = arith.constant 0 : index
    %1 = vector.load %arg5[%c0_2, %c0_3, %c0_4] : memref<1x18x128xf32, #tpu.memory_space<vmem>>, vector<1x18x128xf32>
    tpu.vector_store %arg5[%c0_2, %c0_3, %c0_4], %0 {strides = array<i32>} : memref<1x18x128xf32, #tpu.memory_space<vmem>>, vector<1x18x128xf32>,
    %c0_5 = arith.constant 0 : index
    %c0_6 = arith.constant 0 : index
    %c0_7 = arith.constant 0 : index
    %2 = vector.load %arg5[%c0_5, %c0_6, %c0_7] : memref<1x18x128xf32, #tpu.memory_space<vmem>>, vector<1x16x128xf32>
    %3 = vector.shape_cast %2 : vector<1x16x128xf32> to vector<16x128xf32>
    %c0_8 = arith.constant 0 : index
    %c0_9 = arith.constant 0 : index
    %4 = vector.load %arg6[%c0_8, %c0_9] : memref<16x384xf32, #tpu.memory_space<vmem>>, vector<16x128xf32>
    tpu.vector_store %arg6[%c0_8, %c0_9], %3 {strides = array<i32>} : memref<16x384xf32, #tpu.memory_space<vmem>>, vector<16x128xf32>,
    %c0_10 = arith.constant 0 : index
    %c1 = arith.constant 1 : index
    %c0_11 = arith.constant 0 : index
    %5 = vector.load %arg5[%c0_10, %c1, %c0_11] : memref<1x18x128xf32, #tpu.memory_space<vmem>>, vector<1x16x128xf32>
    %6 = vector.shape_cast %5 : vector<1x16x128xf32> to vector<16x128xf32>
    %c0_12 = arith.constant 0 : index
    %c128 = arith.constant 128 : index
    %7 = vector.load %arg6[%c0_12, %c128] : memref<16x384xf32, #tpu.memory_space<vmem>>, vector<16x128xf32>
    tpu.vector_store %arg6[%c0_12, %c128], %6 {strides = array<i32>} : memref<16x384xf32, #tpu.memory_space<vmem>>, vector<16x128xf32>,
    %c0_13 = arith.constant 0 : index
    %c2 = arith.constant 2 : index
    %c0_14 = arith.constant 0 : index
    %8 = vector.load %arg5[%c0_13, %c2, %c0_14] : memref<1x18x128xf32, #tpu.memory_space<vmem>>, vector<1x16x128xf32>
    %9 = vector.shape_cast %8 : vector<1x16x128xf32> to vector<16x128xf32>
    %c0_15 = arith.constant 0 : index
    %c256 = arith.constant 256 : index
    %10 = vector.load %arg6[%c0_15, %c256] : memref<16x384xf32, #tpu.memory_space<vmem>>, vector<16x128xf32>
    tpu.vector_store %arg6[%c0_15, %c256], %9 {strides = array<i32>} : memref<16x384xf32, #tpu.memory_space<vmem>>, vector<16x128xf32>,
    %c0_16 = arith.constant 0 : index
    %c0_17 = arith.constant 0 : index
    %11 = vector.load %arg6[%c0_16, %c0_17] : memref<16x384xf32, #tpu.memory_space<vmem>>, vector<16x384xf32>
    %c0_18 = arith.constant 0 : index
    %c0_19 = arith.constant 0 : index
    %c0_20 = arith.constant 0 : index
    %12 = vector.load %arg2[%c0_18, %c0_19, %c0_20] : memref<2x384x256xf32, #tpu.memory_space<vmem>>, vector<1x384x256xf32>
    %13 = vector.shape_cast %12 : vector<1x384x256xf32> to vector<384x256xf32>
    %cst = arith.constant dense<0.000000e+00> : vector<16x256xf32>
    %14 = tpu.matmul %11, %13, %cst {dimension_numbers = #tpu.dot_dimension_numbers<[1], [0], [0], [1], [0, 0, 1, 1], [], []>} : vector<16x384xf32>, vector<384x256xf32>, vector<16x256xf32> -> vector<16x256xf32>
    %c0_21 = arith.constant 0 : index
    %c0_22 = arith.constant 0 : index
    %c0_23 = arith.constant 0 : index
    %15 = vector.load %arg3[%c0_21, %c0_22, %c0_23] : memref<2x1x256xf32, #tpu.memory_space<vmem>>, vector<1x1x256xf32>
    %16 = vector.shape_cast %15 : vector<1x1x256xf32> to vector<1x256xf32>
    %17 = vector.broadcast %16 : vector<1x256xf32> to vector<16x256xf32>
    %18 = arith.addf %14, %17 : vector<16x256xf32>
    %19 = vector.extract_strided_slice %18 {offsets = [0, 0], sizes = [16, 128], strides = [1, 1]} : vector<16x256xf32> to vector<16x128xf32>
    %cst_24 = arith.constant 0.000000e+00 : f32
    %20 = vector.broadcast %cst_24 : f32 to vector<16x128xf32>
    %21 = arith.maximumf %19, %20 : vector<16x128xf32>
    %22 = vector.extract_strided_slice %18 {offsets = [0, 128], sizes = [16, 128], strides = [1, 1]} : vector<16x256xf32> to vector<16x128xf32>
    %23 = arith.negf %22 : vector<16x128xf32>
    %24 = math.exp %23 : vector<16x128xf32>
    %cst_25 = arith.constant 1.000000e+00 : f32
    %25 = vector.broadcast %cst_25 : f32 to vector<16x128xf32>
    %26 = arith.addf %25, %24 : vector<16x128xf32>
    %27 = arith.divf %25, %26 : vector<16x128xf32>
    %c0_26 = arith.constant 0 : index
    %c1_27 = arith.constant 1 : index
    %c0_28 = arith.constant 0 : index
    %28 = vector.load %arg5[%c0_26, %c1_27, %c0_28] : memref<1x18x128xf32, #tpu.memory_space<vmem>>, vector<1x16x128xf32>
    %29 = vector.shape_cast %28 : vector<1x16x128xf32> to vector<16x128xf32>
    %30 = arith.subf %21, %29 : vector<16x128xf32>
    %31 = arith.mulf %27, %30 : vector<16x128xf32>
    %32 = arith.addf %29, %31 : vector<16x128xf32>
    %33 = vector.shape_cast %32 : vector<16x128xf32> to vector<1x16x128xf32>
    %c0_29 = arith.constant 0 : index
    %c1_30 = arith.constant 1 : index
    %c0_31 = arith.constant 0 : index
    %34 = vector.load %arg5[%c0_29, %c1_30, %c0_31] : memref<1x18x128xf32, #tpu.memory_space<vmem>>, vector<1x16x128xf32>
    tpu.vector_store %arg5[%c0_29, %c1_30, %c0_31], %33 {strides = array<i32>} : memref<1x18x128xf32, #tpu.memory_space<vmem>>, vector<1x16x128xf32>,
    %c0_32 = arith.constant 0 : index
    %c0_33 = arith.constant 0 : index
    %c0_34 = arith.constant 0 : index
    %35 = vector.load %arg5[%c0_32, %c0_33, %c0_34] : memref<1x18x128xf32, #tpu.memory_space<vmem>>, vector<1x16x128xf32>
    %36 = vector.shape_cast %35 : vector<1x16x128xf32> to vector<16x128xf32>
    %c0_35 = arith.constant 0 : index
    %c0_36 = arith.constant 0 : index
    %37 = vector.load %arg6[%c0_35, %c0_36] : memref<16x384xf32, #tpu.memory_space<vmem>>, vector<16x128xf32>
    tpu.vector_store %arg6[%c0_35, %c0_36], %36 {strides = array<i32>} : memref<16x384xf32, #tpu.memory_space<vmem>>, vector<16x128xf32>,
    %c0_37 = arith.constant 0 : index
    %c1_38 = arith.constant 1 : index
    %c0_39 = arith.constant 0 : index
    %38 = vector.load %arg5[%c0_37, %c1_38, %c0_39] : memref<1x18x128xf32, #tpu.memory_space<vmem>>, vector<1x16x128xf32>
    %39 = vector.shape_cast %38 : vector<1x16x128xf32> to vector<16x128xf32>
    %c0_40 = arith.constant 0 : index
    %c128_41 = arith.constant 128 : index
    %40 = vector.load %arg6[%c0_40, %c128_41] : memref<16x384xf32, #tpu.memory_space<vmem>>, vector<16x128xf32>
    tpu.vector_store %arg6[%c0_40, %c128_41], %39 {strides = array<i32>} : memref<16x384xf32, #tpu.memory_space<vmem>>, vector<16x128xf32>,
    %c0_42 = arith.constant 0 : index
    %c2_43 = arith.constant 2 : index
    %c0_44 = arith.constant 0 : index
    %41 = vector.load %arg5[%c0_42, %c2_43, %c0_44] : memref<1x18x128xf32, #tpu.memory_space<vmem>>, vector<1x16x128xf32>
    %42 = vector.shape_cast %41 : vector<1x16x128xf32> to vector<16x128xf32>
    %c0_45 = arith.constant 0 : index
    %c256_46 = arith.constant 256 : index
    %43 = vector.load %arg6[%c0_45, %c256_46] : memref<16x384xf32, #tpu.memory_space<vmem>>, vector<16x128xf32>
    tpu.vector_store %arg6[%c0_45, %c256_46], %42 {strides = array<i32>} : memref<16x384xf32, #tpu.memory_space<vmem>>, vector<16x128xf32>,
    %c0_47 = arith.constant 0 : index
    %c0_48 = arith.constant 0 : index
    %44 = vector.load %arg6[%c0_47, %c0_48] : memref<16x384xf32, #tpu.memory_space<vmem>>, vector<16x384xf32>
    %c1_49 = arith.constant 1 : index
    %c0_50 = arith.constant 0 : index
    %c0_51 = arith.constant 0 : index
    %45 = vector.load %arg2[%c1_49, %c0_50, %c0_51] : memref<2x384x256xf32, #tpu.memory_space<vmem>>, vector<1x384x256xf32>
    %46 = vector.shape_cast %45 : vector<1x384x256xf32> to vector<384x256xf32>
    %cst_52 = arith.constant dense<0.000000e+00> : vector<16x256xf32>
    %47 = tpu.matmul %44, %46, %cst_52 {dimension_numbers = #tpu.dot_dimension_numbers<[1], [0], [0], [1], [0, 0, 1, 1], [], []>} : vector<16x384xf32>, vector<384x256xf32>, vector<16x256xf32> -> vector<16x256xf32>
    %c1_53 = arith.constant 1 : index
    %c0_54 = arith.constant 0 : index
    %c0_55 = arith.constant 0 : index
    %48 = vector.load %arg3[%c1_53, %c0_54, %c0_55] : memref<2x1x256xf32, #tpu.memory_space<vmem>>, vector<1x1x256xf32>
    %49 = vector.shape_cast %48 : vector<1x1x256xf32> to vector<1x256xf32>
    %50 = vector.broadcast %49 : vector<1x256xf32> to vector<16x256xf32>
    %51 = arith.addf %47, %50 : vector<16x256xf32>
    %52 = vector.extract_strided_slice %51 {offsets = [0, 0], sizes = [16, 128], strides = [1, 1]} : vector<16x256xf32> to vector<16x128xf32>
    %cst_56 = arith.constant 0.000000e+00 : f32
    %53 = vector.broadcast %cst_56 : f32 to vector<16x128xf32>
    %54 = arith.maximumf %52, %53 : vector<16x128xf32>
    %55 = vector.extract_strided_slice %51 {offsets = [0, 128], sizes = [16, 128], strides = [1, 1]} : vector<16x256xf32> to vector<16x128xf32>
    %56 = arith.negf %55 : vector<16x128xf32>
    %57 = math.exp %56 : vector<16x128xf32>
    %cst_57 = arith.constant 1.000000e+00 : f32
    %58 = vector.broadcast %cst_57 : f32 to vector<16x128xf32>
    %59 = arith.addf %58, %57 : vector<16x128xf32>
    %60 = arith.divf %58, %59 : vector<16x128xf32>
    %c0_58 = arith.constant 0 : index
    %c1_59 = arith.constant 1 : index
    %c0_60 = arith.constant 0 : index
    %61 = vector.load %arg5[%c0_58, %c1_59, %c0_60] : memref<1x18x128xf32, #tpu.memory_space<vmem>>, vector<1x16x128xf32>
    %62 = vector.shape_cast %61 : vector<1x16x128xf32> to vector<16x128xf32>
    %63 = arith.subf %54, %62 : vector<16x128xf32>
    %64 = arith.mulf %60, %63 : vector<16x128xf32>
    %65 = arith.addf %62, %64 : vector<16x128xf32>
    %66 = vector.shape_cast %65 : vector<16x128xf32> to vector<1x16x128xf32>
    %c0_61 = arith.constant 0 : index
    %c0_62 = arith.constant 0 : index
    %c0_63 = arith.constant 0 : index
    %67 = vector.load %arg4[%c0_61, %c0_62, %c0_63] : memref<1x16x128xf32, #tpu.memory_space<vmem>>, vector<1x16x128xf32>
    tpu.vector_store %arg4[%c0_61, %c0_62, %c0_63], %66 {strides = array<i32>} : memref<1x16x128xf32, #tpu.memory_space<vmem>>, vector<1x16x128xf32>,
    return
  }
  func.func @transform_0(%arg0: i32) -> (i32, i32, i32) {
    %c0_i32 = arith.constant 0 : i32
    %c0_i32_0 = arith.constant 0 : i32
    %c0_i32_1 = arith.constant 0 : i32
    return %arg0, %c0_i32, %c0_i32_0 : i32, i32, i32
  }
  func.func @transform_1(%arg0: i32) -> (i32, i32, i32) {
    %c0_i32 = arith.constant 0 : i32
    %c0_i32_0 = arith.constant 0 : i32
    %c0_i32_1 = arith.constant 0 : i32
    %c0_i32_2 = arith.constant 0 : i32
    return %c0_i32, %c0_i32_0, %c0_i32_1 : i32, i32, i32
  }
  func.func @transform_2(%arg0: i32) -> (i32, i32, i32) {
    %c0_i32 = arith.constant 0 : i32
    %c0_i32_0 = arith.constant 0 : i32
    %c0_i32_1 = arith.constant 0 : i32
    %c0_i32_2 = arith.constant 0 : i32
    return %c0_i32, %c0_i32_0, %c0_i32_1 : i32, i32, i32
  }
  func.func @transform_3(%arg0: i32) -> (i32, i32, i32) {
    %c0_i32 = arith.constant 0 : i32
    %c0_i32_0 = arith.constant 0 : i32
    %c0_i32_1 = arith.constant 0 : i32
    return %arg0, %c0_i32, %c0_i32_0 : i32, i32, i32
  }
}

</mosaic_0001>

<llo_original>
// kernel: tpu_custom_call.1
$region0: #{tpu_custom_call.1}
  #allocation0 [shape = 'u32[]', space=smem, size = 0x4, offset = 0x4, fixed_abs, tag = 'smem constant byte address 0x4 - core index']
  #allocation1 [shape = 'u32[72,128]{1,0:T(1,128)}', space=vmem, size = 0x9000, scoped, tag = 'internal scratch']
  #allocation2 [shape = 'f32[1,18,128]{2,1,0:T(8,128)}', space=vmem, size = 0x3000, scoped, tag = 'scratch operand']
  #allocation3 [shape = 'f32[16,384]{1,0:T(8,128)}', space=vmem, size = 0x6000, scoped, tag = 'scratch operand']
  %s0 = inlined_call_operand.vmem [shape: f32[1,18,128], index: 0, kind: input, shape index: {}]
  %s1 = inlined_call_operand.hbm [shape: f32[2,384,256], index: 1, kind: input, shape index: {}]
  %s2 = inlined_call_operand.vmem [shape: f32[2,1,256], index: 2, kind: input, shape index: {}]
  %s3 = inlined_call_operand.hbm [shape: f32[1,16,128], index: 3, kind: output, shape index: {}]
  %s4 = sld [smem:[#allocation0]]
  $region26: #{tpu_custom_call.1} parent=0
    _
  %s6 = ssub.s32 1, %s4
  %s7 = scalar_select 0, %s6, %s4
  $region1: #{tpu_custom_call.1} parent=0
    #allocation4 [shape = 'u8[786432]{0}', space=vmem, size = 0xc0000, scoped, tag = 'input window, operand 1, single buffered']
    #allocation5 [shape = 's32[1]{0}', space=sflag, size = 0x4, scoped, tag = 'scoped memory for tpu_custom_call.1']
    #allocation6 [shape = 's32[1]{0}', space=sflag, size = 0x4, scoped, tag = 'scoped memory for tpu_custom_call.1']
    #allocation7 [shape = 'u8[8192]{0}', space=vmem, size = 0x2000, scoped, tag = 'output window, operand 0, single buffered']
    %8 = vsyncpa [#allocation5], 0
    %9 = vsyncpa [#allocation6], 0
    // Predicated region
    $region2: #{tpu_custom_call.1} parent=1 // pred_check
      _
    $region3: #{tpu_custom_call.1} parent=1 // pred_check_branch
      %11 = sbr.rel (0) target = $region5
    $region4: #{tpu_custom_call.1} parent=1 // pred_region
      _
    $region5: #{tpu_custom_call.1} parent=1 // pred_fallthru
      _
    // Predicated region
    $region6: #{tpu_custom_call.1} parent=1 // pred_check
      _
    $region7: #{tpu_custom_call.1} parent=1 // pred_check_branch
      %13 = sbr.rel (0) target = $region9
    $region8: #{tpu_custom_call.1} parent=1 // pred_region
      %15 = vsyncadd [#allocation5], 0
      %s16 = sshll.u32 %s1, 4
      %s17 = int_to_ptr.hbm [resolvable:$true] %s16
      %s18 = sshll.u32 [#allocation4], 4
      %s19 = int_to_ptr.vmem [resolvable:$true] %s18
      %24 = dma.hbm_to_vmem [thread:$0]  %s17, 24576, %s19, [#allocation5], 256, 256, 16
    $region9: #{tpu_custom_call.1} parent=1 // pred_fallthru
      _
    // Predicated region
    $region10: #{tpu_custom_call.1} parent=1 // pred_check
      _
    $region11: #{tpu_custom_call.1} parent=1 // pred_check_branch
      %26 = sbr.rel (0) target = $region13
    $region12: #{tpu_custom_call.1} parent=1 // pred_region
      _
    $region13: #{tpu_custom_call.1} parent=1 // pred_fallthru
      _
    // Predicated region
    $region14: #{tpu_custom_call.1} parent=1 // pred_check
      _
    $region15: #{tpu_custom_call.1} parent=1 // pred_check_branch
      %28 = sbr.rel (0) target = $region17
    $region16: #{tpu_custom_call.1} parent=1 // pred_region
      %30 = dma.done [#allocation5], 24576
    $region17: #{tpu_custom_call.1} parent=1 // pred_fallthru
      _
    %v31 = vld [vmem:[%s0] sm:$0xff]
    %v32 = vld [vmem:[%s0 + $0x8] sm:$0xff]
    %v33 = vld [vmem:[%s0 + $0x10] sm:$0x3]
    %34 = vst [vmem:[#allocation2] sm:$0xff] %v31
    %35 = vst [vmem:[#allocation2 + $0x8] sm:$0xff] %v32
    %36 = vst [vmem:[#allocation2 + $0x10] sm:$0x3] %v33
    %v37 = vld [vmem:[#allocation2] sm:$0xff]
    %v38 = vld [vmem:[#allocation2 + $0x8] sm:$0xff]
    %39 = vst [vmem:[#allocation3] sm:$0xff] %v37
    %40 = vst [vmem:[#allocation3 + $0x18] sm:$0xff] %v38
    %v41 = vld [vmem:[#allocation2 + $0x1] sm:$0xff]
    %v42 = vld [vmem:[#allocation2 + $0x9] sm:$0xff]
    %43 = vst [vmem:[#allocation3 + $0x8] sm:$0xff] %v41
    %44 = vst [vmem:[#allocation3 + $0x20] sm:$0xff] %v42
    %v45 = vld [vmem:[#allocation2 + $0x2] sm:$0xff]
    %v46 = vld [vmem:[#allocation2 + $0xa] sm:$0xff]
    %47 = vst [vmem:[#allocation3 + $0x10] sm:$0xff] %v45
    %48 = vst [vmem:[#allocation3 + $0x28] sm:$0xff] %v46
    %v49 = vld [vmem:[#allocation3] sm:$0xff]
    %v50 = vld [vmem:[#allocation3 + $0x8] sm:$0xff]
    %v51 = vld [vmem:[#allocation3 + $0x10] sm:$0xff]
    %v52 = vld [vmem:[#allocation3 + $0x18] sm:$0xff]
    %v53 = vld [vmem:[#allocation3 + $0x20] sm:$0xff]
    %v54 = vld [vmem:[#allocation3 + $0x28] sm:$0xff]
    %v55 = vld [vmem:[#allocation4] sm:$0xff]
    %v56 = vld [vmem:[#allocation4 + $0x8] sm:$0xff]
    %v57 = vld [vmem:[#allocation4 + $0x10] sm:$0xff]
    %v58 = vld [vmem:[#allocation4 + $0x18] sm:$0xff]
    %v59 = vld [vmem:[#allocation4 + $0x20] sm:$0xff]
    %v60 = vld [vmem:[#allocation4 + $0x28] sm:$0xff]
    %v61 = vld [vmem:[#allocation4 + $0x30] sm:$0xff]
    %v62 = vld [vmem:[#allocation4 + $0x38] sm:$0xff]
    %v63 = vld [vmem:[#allocation4 + $0x40] sm:$0xff]
    %v64 = vld [vmem:[#allocation4 + $0x48] sm:$0xff]
    %v65 = vld [vmem:[#allocation4 + $0x50] sm:$0xff]
    %v66 = vld [vmem:[#allocation4 + $0x58] sm:$0xff]
    %v67 = vld [vmem:[#allocation4 + $0x60] sm:$0xff]
    %v68 = vld [vmem:[#allocation4 + $0x68] sm:$0xff]
    %v69 = vld [vmem:[#allocation4 + $0x70] sm:$0xff]
    %v70 = vld [vmem:[#allocation4 + $0x78] sm:$0xff]
    %v71 = vld [vmem:[#allocation4 + $0x80] sm:$0xff]
    %v72 = vld [vmem:[#allocation4 + $0x88] sm:$0xff]
    %v73 = vld [vmem:[#allocation4 + $0x90] sm:$0xff]
    %v74 = vld [vmem:[#allocation4 + $0x98] sm:$0xff]
    %v75 = vld [vmem:[#allocation4 + $0xa0] sm:$0xff]
    %v76 = vld [vmem:[#allocation4 + $0xa8] sm:$0xff]
    %v77 = vld [vmem:[#allocation4 + $0xb0] sm:$0xff]
    %v78 = vld [vmem:[#allocation4 + $0xb8] sm:$0xff]
    %v79 = vld [vmem:[#allocation4 + $0xc0] sm:$0xff]
    %v80 = vld [vmem:[#allocation4 + $0xc8] sm:$0xff]
    %v81 = vld [vmem:[#allocation4 + $0xd0] sm:$0xff]
    %v82 = vld [vmem:[#allocation4 + $0xd8] sm:$0xff]
    %v83 = vld [vmem:[#allocation4 + $0xe0] sm:$0xff]
    %v84 = vld [vmem:[#allocation4 + $0xe8] sm:$0xff]
    %v85 = vld [vmem:[#allocation4 + $0xf0] sm:$0xff]
    %v86 = vld [vmem:[#allocation4 + $0xf8] sm:$0xff]
    %v87 = vld [vmem:[#allocation4 + $0x100] sm:$0xff]
    %v88 = vld [vmem:[#allocation4 + $0x108] sm:$0xff]
    %v89 = vld [vmem:[#allocation4 + $0x110] sm:$0xff]
    %v90 = vld [vmem:[#allocation4 + $0x118] sm:$0xff]
    %v91 = vld [vmem:[#allocation4 + $0x120] sm:$0xff]
    %v92 = vld [vmem:[#allocation4 + $0x128] sm:$0xff]
    %v93 = vld [vmem:[#allocation4 + $0x130] sm:$0xff]
    %v94 = vld [vmem:[#allocation4 + $0x138] sm:$0xff]
    %v95 = vld [vmem:[#allocation4 + $0x140] sm:$0xff]
    %v96 = vld [vmem:[#allocation4 + $0x148] sm:$0xff]
    %v97 = vld [vmem:[#allocation4 + $0x150] sm:$0xff]
    %v98 = vld [vmem:[#allocation4 + $0x158] sm:$0xff]
    %v99 = vld [vmem:[#allocation4 + $0x160] sm:$0xff]
    %v100 = vld [vmem:[#allocation4 + $0x168] sm:$0xff]
    %v101 = vld [vmem:[#allocation4 + $0x170] sm:$0xff]
    %v102 = vld [vmem:[#allocation4 + $0x178] sm:$0xff]
    %v103 = vld [vmem:[#allocation4 + $0x180] sm:$0xff]
    %v104 = vld [vmem:[#allocation4 + $0x188] sm:$0xff]
    %v105 = vld [vmem:[#allocation4 + $0x190] sm:$0xff]
    %v106 = vld [vmem:[#allocation4 + $0x198] sm:$0xff]
    %v107 = vld [vmem:[#allocation4 + $0x1a0] sm:$0xff]
    %v108 = vld [vmem:[#allocation4 + $0x1a8] sm:$0xff]
    %v109 = vld [vmem:[#allocation4 + $0x1b0] sm:$0xff]
    %v110 = vld [vmem:[#allocation4 + $0x1b8] sm:$0xff]
    %v111 = vld [vmem:[#allocation4 + $0x1c0] sm:$0xff]
    %v112 = vld [vmem:[#allocation4 + $0x1c8] sm:$0xff]
    %v113 = vld [vmem:[#allocation4 + $0x1d0] sm:$0xff]
    %v114 = vld [vmem:[#allocation4 + $0x1d8] sm:$0xff]
    %v115 = vld [vmem:[#allocation4 + $0x1e0] sm:$0xff]
    %v116 = vld [vmem:[#allocation4 + $0x1e8] sm:$0xff]
    %v117 = vld [vmem:[#allocation4 + $0x1f0] sm:$0xff]
    %v118 = vld [vmem:[#allocation4 + $0x1f8] sm:$0xff]
    %v119 = vld [vmem:[#allocation4 + $0x200] sm:$0xff]
    %v120 = vld [vmem:[#allocation4 + $0x208] sm:$0xff]
    %v121 = vld [vmem:[#allocation4 + $0x210] sm:$0xff]
    %v122 = vld [vmem:[#allocation4 + $0x218] sm:$0xff]
    %v123 = vld [vmem:[#allocation4 + $0x220] sm:$0xff]
    %v124 = vld [vmem:[#allocation4 + $0x228] sm:$0xff]
    %v125 = vld [vmem:[#allocation4 + $0x230] sm:$0xff]
    %v126 = vld [vmem:[#allocation4 + $0x238] sm:$0xff]
    %v127 = vld [vmem:[#allocation4 + $0x240] sm:$0xff]
    %v128 = vld [vmem:[#allocation4 + $0x248] sm:$0xff]
    %v129 = vld [vmem:[#allocation4 + $0x250] sm:$0xff]
    %v130 = vld [vmem:[#allocation4 + $0x258] sm:$0xff]
    %v131 = vld [vmem:[#allocation4 + $0x260] sm:$0xff]
    %v132 = vld [vmem:[#allocation4 + $0x268] sm:$0xff]
    %v133 = vld [vmem:[#allocation4 + $0x270] sm:$0xff]
    %v134 = vld [vmem:[#allocation4 + $0x278] sm:$0xff]
    %v135 = vld [vmem:[#allocation4 + $0x280] sm:$0xff]
    %v136 = vld [vmem:[#allocation4 + $0x288] sm:$0xff]
    %v137 = vld [vmem:[#allocation4 + $0x290] sm:$0xff]
    %v138 = vld [vmem:[#allocation4 + $0x298] sm:$0xff]
    %v139 = vld [vmem:[#allocation4 + $0x2a0] sm:$0xff]
    %v140 = vld [vmem:[#allocation4 + $0x2a8] sm:$0xff]
    %v141 = vld [vmem:[#allocation4 + $0x2b0] sm:$0xff]
    %v142 = vld [vmem:[#allocation4 + $0x2b8] sm:$0xff]
    %v143 = vld [vmem:[#allocation4 + $0x2c0] sm:$0xff]
    %v144 = vld [vmem:[#allocation4 + $0x2c8] sm:$0xff]
    %v145 = vld [vmem:[#allocation4 + $0x2d0] sm:$0xff]
    %v146 = vld [vmem:[#allocation4 + $0x2d8] sm:$0xff]
    %v147 = vld [vmem:[#allocation4 + $0x2e0] sm:$0xff]
    %v148 = vld [vmem:[#allocation4 + $0x2e8] sm:$0xff]
    %v149 = vld [vmem:[#allocation4 + $0x2f0] sm:$0xff]
    %v150 = vld [vmem:[#allocation4 + $0x2f8] sm:$0xff]
    %v151 = vld [vmem:[%s2] sm:$0x3]
    %v153 = vperm.slane %v151, 0
    %v154 = vperm.slane %v151, 1
    %157 = vmatpush.msra.mxu0 %v85
    %158 = vmatpush.msra.mxu0 %v83
    %159 = vmatpush.msra.mxu0 %v81
    %160 = vmatpush.msra.mxu0 %v79
    %161 = vmatpush.msra.mxu0 %v77
    %162 = vmatpush.msra.mxu0 %v75
    %163 = vmatpush.msra.mxu0 %v73
    %164 = vmatpush.msra.mxu0 %v71
    %165 = vmatpush.msra.mxu0 %v69
    %166 = vmatpush.msra.mxu0 %v67
    %167 = vmatpush.msra.mxu0 %v65
    %168 = vmatpush.msra.mxu0 %v63
    %169 = vmatpush.msra.mxu0 %v61
    %170 = vmatpush.msra.mxu0 %v59
    %171 = vmatpush.msra.mxu0 %v57
    %172 = vmatpush.msra.mxu0 %v55
    %173 = vmatmul.f32.gmra.mxu0 %v49
    %v174 = vpop.f32.mrf.mxu0
    %v175 = vadd.f32 %v153, %v174
    %176 = vmatmul.f32.gmra.mxu0 %v52
    %v177 = vpop.f32.mrf.mxu0
    %v178 = vadd.f32 %v153, %v177
    %179 = vdwg.mxu0
    %180 = vmatpush.msra.mxu0 %v117
    %181 = vmatpush.msra.mxu0 %v115
    %182 = vmatpush.msra.mxu0 %v113
    %183 = vmatpush.msra.mxu0 %v111
    %184 = vmatpush.msra.mxu0 %v109
    %185 = vmatpush.msra.mxu0 %v107
    %186 = vmatpush.msra.mxu0 %v105
    %187 = vmatpush.msra.mxu0 %v103
    %188 = vmatpush.msra.mxu0 %v101
    %189 = vmatpush.msra.mxu0 %v99
    %190 = vmatpush.msra.mxu0 %v97
    %191 = vmatpush.msra.mxu0 %v95
    %192 = vmatpush.msra.mxu0 %v93
    %193 = vmatpush.msra.mxu0 %v91
    %194 = vmatpush.msra.mxu0 %v89
    %195 = vmatpush.msra.mxu0 %v87
    %196 = vmatmul.f32.gmra.mxu0 %v50
    %v197 = vpop.f32.mrf.mxu0
    %v198 = vadd.f32 %v175, %v197
    %199 = vmatmul.f32.gmra.mxu0 %v53
    %v200 = vpop.f32.mrf.mxu0
    %v201 = vadd.f32 %v178, %v200
    %202 = vdwg.mxu0
    %203 = vmatpush.msra.mxu0 %v149
    %204 = vmatpush.msra.mxu0 %v147
    %205 = vmatpush.msra.mxu0 %v145
    %206 = vmatpush.msra.mxu0 %v143
    %207 = vmatpush.msra.mxu0 %v141
    %208 = vmatpush.msra.mxu0 %v139
    %209 = vmatpush.msra.mxu0 %v137
    %210 = vmatpush.msra.mxu0 %v135
    %211 = vmatpush.msra.mxu0 %v133
    %212 = vmatpush.msra.mxu0 %v131
    %213 = vmatpush.msra.mxu0 %v129
    %214 = vmatpush.msra.mxu0 %v127
    %215 = vmatpush.msra.mxu0 %v125
    %216 = vmatpush.msra.mxu0 %v123
    %217 = vmatpush.msra.mxu0 %v121
    %218 = vmatpush.msra.mxu0 %v119
    %219 = vmatmul.f32.gmra.mxu0 %v51
    %v220 = vpop.f32.mrf.mxu0
    %v221 = vadd.f32 %v198, %v220
    %222 = vmatmul.f32.gmra.mxu0 %v54
    %v223 = vpop.f32.mrf.mxu0
    %v224 = vadd.f32 %v201, %v223
    %225 = vdwg.mxu0
    %226 = vmatpush.msra.mxu0 %v86
    %227 = vmatpush.msra.mxu0 %v84
    %228 = vmatpush.msra.mxu0 %v82
    %229 = vmatpush.msra.mxu0 %v80
    %230 = vmatpush.msra.mxu0 %v78
    %231 = vmatpush.msra.mxu0 %v76
    %232 = vmatpush.msra.mxu0 %v74
    %233 = vmatpush.msra.mxu0 %v72
    %234 = vmatpush.msra.mxu0 %v70
    %235 = vmatpush.msra.mxu0 %v68
    %236 = vmatpush.msra.mxu0 %v66
    %237 = vmatpush.msra.mxu0 %v64
    %238 = vmatpush.msra.mxu0 %v62
    %239 = vmatpush.msra.mxu0 %v60
    %240 = vmatpush.msra.mxu0 %v58
    %241 = vmatpush.msra.mxu0 %v56
    %242 = vmatmul.f32.gmra.mxu0 %v49
    %v243 = vpop.f32.mrf.mxu0
    %v244 = vadd.f32 %v154, %v243
    %245 = vmatmul.f32.gmra.mxu0 %v52
    %v246 = vpop.f32.mrf.mxu0
    %v247 = vadd.f32 %v154, %v246
    %248 = vdwg.mxu0
    %249 = vmatpush.msra.mxu0 %v118
    %250 = vmatpush.msra.mxu0 %v116
    %251 = vmatpush.msra.mxu0 %v114
    %252 = vmatpush.msra.mxu0 %v112
    %253 = vmatpush.msra.mxu0 %v110
    %254 = vmatpush.msra.mxu0 %v108
    %255 = vmatpush.msra.mxu0 %v106
    %256 = vmatpush.msra.mxu0 %v104
    %257 = vmatpush.msra.mxu0 %v102
    %258 = vmatpush.msra.mxu0 %v100
    %259 = vmatpush.msra.mxu0 %v98
    %260 = vmatpush.msra.mxu0 %v96
    %261 = vmatpush.msra.mxu0 %v94
    %262 = vmatpush.msra.mxu0 %v92
    %263 = vmatpush.msra.mxu0 %v90
    %264 = vmatpush.msra.mxu0 %v88
    %265 = vmatmul.f32.gmra.mxu0 %v50
    %v266 = vpop.f32.mrf.mxu0
    %v267 = vadd.f32 %v244, %v266
    %268 = vmatmul.f32.gmra.mxu0 %v53
    %v269 = vpop.f32.mrf.mxu0
    %v270 = vadd.f32 %v247, %v269
    %271 = vdwg.mxu0
    %272 = vmatpush.msra.mxu0 %v150
    %273 = vmatpush.msra.mxu0 %v148
    %274 = vmatpush.msra.mxu0 %v146
    %275 = vmatpush.msra.mxu0 %v144
    %276 = vmatpush.msra.mxu0 %v142
    %277 = vmatpush.msra.mxu0 %v140
    %278 = vmatpush.msra.mxu0 %v138
    %279 = vmatpush.msra.mxu0 %v136
    %280 = vmatpush.msra.mxu0 %v134
    %281 = vmatpush.msra.mxu0 %v132
    %282 = vmatpush.msra.mxu0 %v130
    %283 = vmatpush.msra.mxu0 %v128
    %284 = vmatpush.msra.mxu0 %v126
    %285 = vmatpush.msra.mxu0 %v124
    %286 = vmatpush.msra.mxu0 %v122
    %287 = vmatpush.msra.mxu0 %v120
    %288 = vmatmul.f32.gmra.mxu0 %v51
    %v289 = vpop.f32.mrf.mxu0
    %v290 = vadd.f32 %v267, %v289
    %291 = vmatmul.f32.gmra.mxu0 %v54
    %v292 = vpop.f32.mrf.mxu0
    %v293 = vadd.f32 %v270, %v292
    %294 = vdwg.mxu0
    %v295 = vmax.f32 %v221, 0.0
    %v296 = vmax.f32 %v224, 0.0
    %v297 = vxor.u32 %v290, 2147483648
    %v298 = vxor.u32 %v293, 2147483648
    %v299 = vmul.f32 %v297, 1.442695
    %v300 = vpow.pop %v299
    %v301 = vmul.f32 %v298, 1.442695
    %v302 = vpow.pop %v301
    %v303 = vadd.f32 %v300, 1.0
    %v304 = vadd.f32 %v302, 1.0
    %v305 = vrcp.pop %v303
    %v306 = vmul.f32 %v303, %v305
    %v307 = vsub.f32 1.0, %v306
    %v308 = vmul.f32 %v305, %v307
    %v309 = vadd.f32 %v305, %v308
    %vm310 = vweird.f32 %v303
    %vm311 = vweird.f32 %v305
    %vm312 = vmor %vm310, %vm311
    %v313 = vsel %vm312, %v305, %v309
    %v314 = vand.u32 2147483647, %v303
    %vm315 = vcmp.eq.f32.partialorder %v314, 8.507059e+37
    %v316 = vand.u32 %v303, 2147483648
    %v317 = vor.u32 1.1754944e-38, %v316
    %v318 = vsel %vm315, %v317, %v313
    %v319 = vmul.f32 1.0, %v318
    %v320 = vrcp.pop %v304
    %v321 = vmul.f32 %v304, %v320
    %v322 = vsub.f32 1.0, %v321
    %v323 = vmul.f32 %v320, %v322
    %v324 = vadd.f32 %v320, %v323
    %vm325 = vweird.f32 %v304
    %vm326 = vweird.f32 %v320
    %vm327 = vmor %vm325, %vm326
    %v328 = vsel %vm327, %v320, %v324
    %v329 = vand.u32 2147483647, %v304
    %vm330 = vcmp.eq.f32.partialorder %v329, 8.507059e+37
    %v331 = vand.u32 %v304, 2147483648
    %v332 = vor.u32 1.1754944e-38, %v331
    %v333 = vsel %vm330, %v332, %v328
    %v334 = vmul.f32 1.0, %v333
    %v335 = vld [vmem:[#allocation2 + $0x1] sm:$0xff]
    %v336 = vld [vmem:[#allocation2 + $0x9] sm:$0xff]
    %v337 = vsub.f32 %v295, %v335
    %v338 = vsub.f32 %v296, %v336
    %v339 = vmul.f32 %v319, %v337
    %v340 = vmul.f32 %v334, %v338
    %v341 = vadd.f32 %v335, %v339
    %v342 = vadd.f32 %v336, %v340
    %343 = vst [vmem:[#allocation2 + $0x1] sm:$0xff] %v341
    %344 = vst [vmem:[#allocation2 + $0x9] sm:$0xff] %v342
    %v345 = vld [vmem:[#allocation2] sm:$0xff]
    %v346 = vld [vmem:[#allocation2 + $0x8] sm:$0xff]
    %347 = vst [vmem:[#allocation3] sm:$0xff] %v345
    %348 = vst [vmem:[#allocation3 + $0x18] sm:$0xff] %v346
    %v349 = vld [vmem:[#allocation2 + $0x1] sm:$0xff]
    %v350 = vld [vmem:[#allocation2 + $0x9] sm:$0xff]
    %351 = vst [vmem:[#allocation3 + $0x8] sm:$0xff] %v349
    %352 = vst [vmem:[#allocation3 + $0x20] sm:$0xff] %v350
    %v353 = vld [vmem:[#allocation2 + $0x2] sm:$0xff]
    %v354 = vld [vmem:[#allocation2 + $0xa] sm:$0xff]
    %355 = vst [vmem:[#allocation3 + $0x10] sm:$0xff] %v353
    %356 = vst [vmem:[#allocation3 + $0x28] sm:$0xff] %v354
    %v357 = vld [vmem:[#allocation3] sm:$0xff]
    %v358 = vld [vmem:[#allocation3 + $0x8] sm:$0xff]
    %v359 = vld [vmem:[#allocation3 + $0x10] sm:$0xff]
    %v360 = vld [vmem:[#allocation3 + $0x18] sm:$0xff]
    %v361 = vld [vmem:[#allocation3 + $0x20] sm:$0xff]
    %v362 = vld [vmem:[#allocation3 + $0x28] sm:$0xff]
    %s363 = scalar_lea.vmem [#allocation4], 768
    %v364 = vld [vmem:[%s363] sm:$0xff]
    %v365 = vld [vmem:[%s363 + $0x8] sm:$0xff]
    %v366 = vld [vmem:[%s363 + $0x10] sm:$0xff]
    %v367 = vld [vmem:[%s363 + $0x18] sm:$0xff]
    %v368 = vld [vmem:[%s363 + $0x20] sm:$0xff]
    %v369 = vld [vmem:[%s363 + $0x28] sm:$0xff]
    %v370 = vld [vmem:[%s363 + $0x30] sm:$0xff]
    %v371 = vld [vmem:[%s363 + $0x38] sm:$0xff]
    %v372 = vld [vmem:[%s363 + $0x40] sm:$0xff]
    %v373 = vld [vmem:[%s363 + $0x48] sm:$0xff]
    %v374 = vld [vmem:[%s363 + $0x50] sm:$0xff]
    %v375 = vld [vmem:[%s363 + $0x58] sm:$0xff]
    %v376 = vld [vmem:[%s363 + $0x60] sm:$0xff]
    %v377 = vld [vmem:[%s363 + $0x68] sm:$0xff]
    %v378 = vld [vmem:[%s363 + $0x70] sm:$0xff]
    %v379 = vld [vmem:[%s363 + $0x78] sm:$0xff]
    %v380 = vld [vmem:[%s363 + $0x80] sm:$0xff]
    %v381 = vld [vmem:[%s363 + $0x88] sm:$0xff]
    %v382 = vld [vmem:[%s363 + $0x90] sm:$0xff]
    %v383 = vld [vmem:[%s363 + $0x98] sm:$0xff]
    %v384 = vld [vmem:[%s363 + $0xa0] sm:$0xff]
    %v385 = vld [vmem:[%s363 + $0xa8] sm:$0xff]
    %v386 = vld [vmem:[%s363 + $0xb0] sm:$0xff]
    %v387 = vld [vmem:[%s363 + $0xb8] sm:$0xff]
    %v388 = vld [vmem:[%s363 + $0xc0] sm:$0xff]
    %v389 = vld [vmem:[%s363 + $0xc8] sm:$0xff]
    %v390 = vld [vmem:[%s363 + $0xd0] sm:$0xff]
    %v391 = vld [vmem:[%s363 + $0xd8] sm:$0xff]
    %v392 = vld [vmem:[%s363 + $0xe0] sm:$0xff]
    %v393 = vld [vmem:[%s363 + $0xe8] sm:$0xff]
    %v394 = vld [vmem:[%s363 + $0xf0] sm:$0xff]
    %v395 = vld [vmem:[%s363 + $0xf8] sm:$0xff]
    %v396 = vld [vmem:[%s363 + $0x100] sm:$0xff]
    %v397 = vld [vmem:[%s363 + $0x108] sm:$0xff]
    %v398 = vld [vmem:[%s363 + $0x110] sm:$0xff]
    %v399 = vld [vmem:[%s363 + $0x118] sm:$0xff]
    %v400 = vld [vmem:[%s363 + $0x120] sm:$0xff]
    %v401 = vld [vmem:[%s363 + $0x128] sm:$0xff]
    %v402 = vld [vmem:[%s363 + $0x130] sm:$0xff]
    %v403 = vld [vmem:[%s363 + $0x138] sm:$0xff]
    %v404 = vld [vmem:[%s363 + $0x140] sm:$0xff]
    %v405 = vld [vmem:[%s363 + $0x148] sm:$0xff]
    %v406 = vld [vmem:[%s363 + $0x150] sm:$0xff]
    %v407 = vld [vmem:[%s363 + $0x158] sm:$0xff]
    %v408 = vld [vmem:[%s363 + $0x160] sm:$0xff]
    %v409 = vld [vmem:[%s363 + $0x168] sm:$0xff]
    %v410 = vld [vmem:[%s363 + $0x170] sm:$0xff]
    %v411 = vld [vmem:[%s363 + $0x178] sm:$0xff]
    %v412 = vld [vmem:[%s363 + $0x180] sm:$0xff]
    %v413 = vld [vmem:[%s363 + $0x188] sm:$0xff]
    %v414 = vld [vmem:[%s363 + $0x190] sm:$0xff]
    %v415 = vld [vmem:[%s363 + $0x198] sm:$0xff]
    %v416 = vld [vmem:[%s363 + $0x1a0] sm:$0xff]
    %v417 = vld [vmem:[%s363 + $0x1a8] sm:$0xff]
    %v418 = vld [vmem:[%s363 + $0x1b0] sm:$0xff]
    %v419 = vld [vmem:[%s363 + $0x1b8] sm:$0xff]
    %v420 = vld [vmem:[%s363 + $0x1c0] sm:$0xff]
    %v421 = vld [vmem:[%s363 + $0x1c8] sm:$0xff]
    %v422 = vld [vmem:[%s363 + $0x1d0] sm:$0xff]
    %v423 = vld [vmem:[%s363 + $0x1d8] sm:$0xff]
    %v424 = vld [vmem:[%s363 + $0x1e0] sm:$0xff]
    %v425 = vld [vmem:[%s363 + $0x1e8] sm:$0xff]
    %v426 = vld [vmem:[%s363 + $0x1f0] sm:$0xff]
    %v427 = vld [vmem:[%s363 + $0x1f8] sm:$0xff]
    %v428 = vld [vmem:[%s363 + $0x200] sm:$0xff]
    %v429 = vld [vmem:[%s363 + $0x208] sm:$0xff]
    %v430 = vld [vmem:[%s363 + $0x210] sm:$0xff]
    %v431 = vld [vmem:[%s363 + $0x218] sm:$0xff]
    %v432 = vld [vmem:[%s363 + $0x220] sm:$0xff]
    %v433 = vld [vmem:[%s363 + $0x228] sm:$0xff]
    %v434 = vld [vmem:[%s363 + $0x230] sm:$0xff]
    %v435 = vld [vmem:[%s363 + $0x238] sm:$0xff]
    %v436 = vld [vmem:[%s363 + $0x240] sm:$0xff]
    %v437 = vld [vmem:[%s363 + $0x248] sm:$0xff]
    %v438 = vld [vmem:[%s363 + $0x250] sm:$0xff]
    %v439 = vld [vmem:[%s363 + $0x258] sm:$0xff]
    %v440 = vld [vmem:[%s363 + $0x260] sm:$0xff]
    %v441 = vld [vmem:[%s363 + $0x268] sm:$0xff]
    %v442 = vld [vmem:[%s363 + $0x270] sm:$0xff]
    %v443 = vld [vmem:[%s363 + $0x278] sm:$0xff]
    %v444 = vld [vmem:[%s363 + $0x280] sm:$0xff]
    %v445 = vld [vmem:[%s363 + $0x288] sm:$0xff]
    %v446 = vld [vmem:[%s363 + $0x290] sm:$0xff]
    %v447 = vld [vmem:[%s363 + $0x298] sm:$0xff]
    %v448 = vld [vmem:[%s363 + $0x2a0] sm:$0xff]
    %v449 = vld [vmem:[%s363 + $0x2a8] sm:$0xff]
    %v450 = vld [vmem:[%s363 + $0x2b0] sm:$0xff]
    %v451 = vld [vmem:[%s363 + $0x2b8] sm:$0xff]
    %v452 = vld [vmem:[%s363 + $0x2c0] sm:$0xff]
    %v453 = vld [vmem:[%s363 + $0x2c8] sm:$0xff]
    %v454 = vld [vmem:[%s363 + $0x2d0] sm:$0xff]
    %v455 = vld [vmem:[%s363 + $0x2d8] sm:$0xff]
    %v456 = vld [vmem:[%s363 + $0x2e0] sm:$0xff]
    %v457 = vld [vmem:[%s363 + $0x2e8] sm:$0xff]
    %v458 = vld [vmem:[%s363 + $0x2f0] sm:$0xff]
    %v459 = vld [vmem:[%s363 + $0x2f8] sm:$0xff]
    %s460 = scalar_lea.vmem %s2, 2
    %v461 = vld [vmem:[%s460] sm:$0x3]
    %v463 = vperm.slane %v461, 0
    %v464 = vperm.slane %v461, 1
    %467 = vmatpush.msra.mxu0 %v394
    %468 = vmatpush.msra.mxu0 %v392
    %469 = vmatpush.msra.mxu0 %v390
    %470 = vmatpush.msra.mxu0 %v388
    %471 = vmatpush.msra.mxu0 %v386
    %472 = vmatpush.msra.mxu0 %v384
    %473 = vmatpush.msra.mxu0 %v382
    %474 = vmatpush.msra.mxu0 %v380
    %475 = vmatpush.msra.mxu0 %v378
    %476 = vmatpush.msra.mxu0 %v376
    %477 = vmatpush.msra.mxu0 %v374
    %478 = vmatpush.msra.mxu0 %v372
    %479 = vmatpush.msra.mxu0 %v370
    %480 = vmatpush.msra.mxu0 %v368
    %481 = vmatpush.msra.mxu0 %v366
    %482 = vmatpush.msra.mxu0 %v364
    %483 = vmatmul.f32.gmra.mxu0 %v357
    %v484 = vpop.f32.mrf.mxu0
    %v485 = vadd.f32 %v463, %v484
    %486 = vmatmul.f32.gmra.mxu0 %v360
    %v487 = vpop.f32.mrf.mxu0
    %v488 = vadd.f32 %v463, %v487
    %489 = vdwg.mxu0
    %490 = vmatpush.msra.mxu0 %v426
    %491 = vmatpush.msra.mxu0 %v424
    %492 = vmatpush.msra.mxu0 %v422
    %493 = vmatpush.msra.mxu0 %v420
    %494 = vmatpush.msra.mxu0 %v418
    %495 = vmatpush.msra.mxu0 %v416
    %496 = vmatpush.msra.mxu0 %v414
    %497 = vmatpush.msra.mxu0 %v412
    %498 = vmatpush.msra.mxu0 %v410
    %499 = vmatpush.msra.mxu0 %v408
    %500 = vmatpush.msra.mxu0 %v406
    %501 = vmatpush.msra.mxu0 %v404
    %502 = vmatpush.msra.mxu0 %v402
    %503 = vmatpush.msra.mxu0 %v400
    %504 = vmatpush.msra.mxu0 %v398
    %505 = vmatpush.msra.mxu0 %v396
    %506 = vmatmul.f32.gmra.mxu0 %v358
    %v507 = vpop.f32.mrf.mxu0
    %v508 = vadd.f32 %v485, %v507
    %509 = vmatmul.f32.gmra.mxu0 %v361
    %v510 = vpop.f32.mrf.mxu0
    %v511 = vadd.f32 %v488, %v510
    %512 = vdwg.mxu0
    %513 = vmatpush.msra.mxu0 %v458
    %514 = vmatpush.msra.mxu0 %v456
    %515 = vmatpush.msra.mxu0 %v454
    %516 = vmatpush.msra.mxu0 %v452
    %517 = vmatpush.msra.mxu0 %v450
    %518 = vmatpush.msra.mxu0 %v448
    %519 = vmatpush.msra.mxu0 %v446
    %520 = vmatpush.msra.mxu0 %v444
    %521 = vmatpush.msra.mxu0 %v442
    %522 = vmatpush.msra.mxu0 %v440
    %523 = vmatpush.msra.mxu0 %v438
    %524 = vmatpush.msra.mxu0 %v436
    %525 = vmatpush.msra.mxu0 %v434
    %526 = vmatpush.msra.mxu0 %v432
    %527 = vmatpush.msra.mxu0 %v430
    %528 = vmatpush.msra.mxu0 %v428
    %529 = vmatmul.f32.gmra.mxu0 %v359
    %v530 = vpop.f32.mrf.mxu0
    %v531 = vadd.f32 %v508, %v530
    %532 = vmatmul.f32.gmra.mxu0 %v362
    %v533 = vpop.f32.mrf.mxu0
    %v534 = vadd.f32 %v511, %v533
    %535 = vdwg.mxu0
    %536 = vmatpush.msra.mxu0 %v395
    %537 = vmatpush.msra.mxu0 %v393
    %538 = vmatpush.msra.mxu0 %v391
    %539 = vmatpush.msra.mxu0 %v389
    %540 = vmatpush.msra.mxu0 %v387
    %541 = vmatpush.msra.mxu0 %v385
    %542 = vmatpush.msra.mxu0 %v383
    %543 = vmatpush.msra.mxu0 %v381
    %544 = vmatpush.msra.mxu0 %v379
    %545 = vmatpush.msra.mxu0 %v377
    %546 = vmatpush.msra.mxu0 %v375
    %547 = vmatpush.msra.mxu0 %v373
    %548 = vmatpush.msra.mxu0 %v371
    %549 = vmatpush.msra.mxu0 %v369
    %550 = vmatpush.msra.mxu0 %v367
    %551 = vmatpush.msra.mxu0 %v365
    %552 = vmatmul.f32.gmra.mxu0 %v357
    %v553 = vpop.f32.mrf.mxu0
    %v554 = vadd.f32 %v464, %v553
    %555 = vmatmul.f32.gmra.mxu0 %v360
    %v556 = vpop.f32.mrf.mxu0
    %v557 = vadd.f32 %v464, %v556
    %558 = vdwg.mxu0
    %559 = vmatpush.msra.mxu0 %v427
    %560 = vmatpush.msra.mxu0 %v425
    %561 = vmatpush.msra.mxu0 %v423
    %562 = vmatpush.msra.mxu0 %v421
    %563 = vmatpush.msra.mxu0 %v419
    %564 = vmatpush.msra.mxu0 %v417
    %565 = vmatpush.msra.mxu0 %v415
    %566 = vmatpush.msra.mxu0 %v413
    %567 = vmatpush.msra.mxu0 %v411
    %568 = vmatpush.msra.mxu0 %v409
    %569 = vmatpush.msra.mxu0 %v407
    %570 = vmatpush.msra.mxu0 %v405
    %571 = vmatpush.msra.mxu0 %v403
    %572 = vmatpush.msra.mxu0 %v401
    %573 = vmatpush.msra.mxu0 %v399
    %574 = vmatpush.msra.mxu0 %v397
    %575 = vmatmul.f32.gmra.mxu0 %v358
    %v576 = vpop.f32.mrf.mxu0
    %v577 = vadd.f32 %v554, %v576
    %578 = vmatmul.f32.gmra.mxu0 %v361
    %v579 = vpop.f32.mrf.mxu0
    %v580 = vadd.f32 %v557, %v579
    %581 = vdwg.mxu0
    %582 = vmatpush.msra.mxu0 %v459
    %583 = vmatpush.msra.mxu0 %v457
    %584 = vmatpush.msra.mxu0 %v455
    %585 = vmatpush.msra.mxu0 %v453
    %586 = vmatpush.msra.mxu0 %v451
    %587 = vmatpush.msra.mxu0 %v449
    %588 = vmatpush.msra.mxu0 %v447
    %589 = vmatpush.msra.mxu0 %v445
    %590 = vmatpush.msra.mxu0 %v443
    %591 = vmatpush.msra.mxu0 %v441
    %592 = vmatpush.msra.mxu0 %v439
    %593 = vmatpush.msra.mxu0 %v437
    %594 = vmatpush.msra.mxu0 %v435
    %595 = vmatpush.msra.mxu0 %v433
    %596 = vmatpush.msra.mxu0 %v431
    %597 = vmatpush.msra.mxu0 %v429
    %598 = vmatmul.f32.gmra.mxu0 %v359
    %v599 = vpop.f32.mrf.mxu0
    %v600 = vadd.f32 %v577, %v599
    %601 = vmatmul.f32.gmra.mxu0 %v362
    %v602 = vpop.f32.mrf.mxu0
    %v603 = vadd.f32 %v580, %v602
    %604 = vdwg.mxu0
    %v605 = vmax.f32 %v531, 0.0
    %v606 = vmax.f32 %v534, 0.0
    %v607 = vxor.u32 %v600, 2147483648
    %v608 = vxor.u32 %v603, 2147483648
    %v609 = vmul.f32 %v607, 1.442695
    %v610 = vpow.pop %v609
    %v611 = vmul.f32 %v608, 1.442695
    %v612 = vpow.pop %v611
    %v613 = vadd.f32 %v610, 1.0
    %v614 = vadd.f32 %v612, 1.0
    %v615 = vrcp.pop %v613
    %v616 = vmul.f32 %v613, %v615
    %v617 = vsub.f32 1.0, %v616
    %v618 = vmul.f32 %v615, %v617
    %v619 = vadd.f32 %v615, %v618
    %vm620 = vweird.f32 %v613
    %vm621 = vweird.f32 %v615
    %vm622 = vmor %vm620, %vm621
    %v623 = vsel %vm622, %v615, %v619
    %v624 = vand.u32 2147483647, %v613
    %vm625 = vcmp.eq.f32.partialorder %v624, 8.507059e+37
    %v626 = vand.u32 %v613, 2147483648
    %v627 = vor.u32 1.1754944e-38, %v626
    %v628 = vsel %vm625, %v627, %v623
    %v629 = vmul.f32 1.0, %v628
    %v630 = vrcp.pop %v614
    %v631 = vmul.f32 %v614, %v630
    %v632 = vsub.f32 1.0, %v631
    %v633 = vmul.f32 %v630, %v632
    %v634 = vadd.f32 %v630, %v633
    %vm635 = vweird.f32 %v614
    %vm636 = vweird.f32 %v630
    %vm637 = vmor %vm635, %vm636
    %v638 = vsel %vm637, %v630, %v634
    %v639 = vand.u32 2147483647, %v614
    %vm640 = vcmp.eq.f32.partialorder %v639, 8.507059e+37
    %v641 = vand.u32 %v614, 2147483648
    %v642 = vor.u32 1.1754944e-38, %v641
    %v643 = vsel %vm640, %v642, %v638
    %v644 = vmul.f32 1.0, %v643
    %v645 = vld [vmem:[#allocation2 + $0x1] sm:$0xff]
    %v646 = vld [vmem:[#allocation2 + $0x9] sm:$0xff]
    %v647 = vsub.f32 %v605, %v645
    %v648 = vsub.f32 %v606, %v646
    %v649 = vmul.f32 %v629, %v647
    %v650 = vmul.f32 %v644, %v648
    %v651 = vadd.f32 %v645, %v649
    %v652 = vadd.f32 %v646, %v650
    %653 = vst [vmem:[#allocation7] sm:$0xff] %v651
    %654 = vst [vmem:[#allocation7 + $0x8] sm:$0xff] %v652
    // Predicated region
    $region18: #{tpu_custom_call.1} parent=1 // pred_check
      _
    $region19: #{tpu_custom_call.1} parent=1 // pred_check_branch
      %656 = sbr.rel (0) target = $region21
    $region20: #{tpu_custom_call.1} parent=1 // pred_region
      %658 = vsyncadd [#allocation6], 0
      %s659 = sshll.u32 [#allocation7], 4
      %s660 = int_to_ptr.vmem [resolvable:$true] %s659
      %s661 = sshll.u32 %s3, 4
      %s662 = int_to_ptr.hbm [resolvable:$true] %s661
      %667 = dma.vmem_to_hbm [thread:$0]  %s660, 256, %s662, [#allocation6], 128, 128, 8
    $region21: #{tpu_custom_call.1} parent=1 // pred_fallthru
      _
    // Predicated region
    $region22: #{tpu_custom_call.1} parent=1 // pred_check
      _
    $region23: #{tpu_custom_call.1} parent=1 // pred_check_branch
      %669 = sbr.rel (0) target = $region25
    $region24: #{tpu_custom_call.1} parent=1 // pred_region
      %671 = dma.done [#allocation6], 256
    $region25: #{tpu_custom_call.1} parent=1 // pred_fallthru
      _
    %672 = vsyncpa [#allocation5], 1
    %673 = vsyncpa [#allocation6], 1

</llo_original>
